<compile_context>
chip_gen: v7x
topology: tpu7x:2x2x1
jax: 0.10.0
libtpu: 0.0.40
codegen_flags: <defaults>
</compile_context>

<pallas_src>
import functools

import jax
import jax.numpy as jnp
from jax.experimental import pallas as pl
from jax.experimental.pallas import tpu as pltpu


def residual_kernel(x_ref, w_ref, b_ref, xres_ref, o_ref, acc_ref):
    # x_ref:    (tm, tk)  bf16   matmul LHS tile, indexed (i, k)
    # w_ref:    (tk, tn)  bf16   matmul RHS tile, indexed (k, j)
    # b_ref:    (1,  tn)  bf16   bias tile,       indexed (0, j)
    # xres_ref: (tm, tn)  bf16   residual x tile, indexed (i, j)
    # o_ref:    (tm, tn)  bf16   output tile,     indexed (i, j)
    # acc_ref:  (tm, tn)  f32    VMEM accumulator scratch
    k = pl.program_id(2)

    @pl.when(k == 0)
    def _init():
        acc_ref[...] = jnp.zeros_like(acc_ref)

    acc_ref[...] += jnp.dot(
        x_ref[...], w_ref[...], preferred_element_type=jnp.float32
    )

    @pl.when(k == pl.num_programs(2) - 1)
    def _finalize():
        out = (
            acc_ref[...]
            + b_ref[...].astype(jnp.float32)
            + xres_ref[...].astype(jnp.float32)
        )
        o_ref[...] = out.astype(o_ref.dtype)


@functools.partial(jax.jit, static_argnames=("tm", "tn", "tk"))
def residual_forward(x, w, b, *, tm=128, tn=128, tk=128):
    """x: (B, S, D); w: (D, D); b: (D,). Returns Linear(x) + x, same shape/dtype as x."""
    B, S, D = x.shape
    M = B * S
    assert M % tm == 0 and D % tn == 0 and D % tk == 0, (
        "toy wrapper assumes tile-divisible shapes", (M, D, tm, tn, tk))

    x2d = x.reshape(M, D)          # rows -> sublanes, hidden -> lanes
    b2d = b.reshape(1, D)

    grid = (M // tm, D // tn, D // tk)
    bytes_per_elem = x2d.dtype.itemsize
    cost = pl.CostEstimate(
        flops=2 * M * D * D,
        transcendentals=0,
        bytes_accessed=bytes_per_elem
        * (M * D * (D // tn)        # x matmul tiles (re-read per j)
           + D * D * (M // tm)      # w tiles (re-read per i)
           + M * D                  # residual x
           + M * D),                # output
    )

    out2d = pl.pallas_call(
        residual_kernel,
        out_shape=jax.ShapeDtypeStruct((M, D), x.dtype),
        grid_spec=pltpu.PrefetchScalarGridSpec(
            num_scalar_prefetch=0,
            grid=grid,
            in_specs=[
                pl.BlockSpec((tm, tk), lambda i, j, k: (i, k)),   # x for matmul
                pl.BlockSpec((tk, tn), lambda i, j, k: (k, j)),   # w
                pl.BlockSpec((1, tn), lambda i, j, k: (0, j)),    # bias
                pl.BlockSpec((tm, tn), lambda i, j, k: (i, j)),   # x for residual
            ],
            out_specs=pl.BlockSpec((tm, tn), lambda i, j, k: (i, j)),
            scratch_shapes=[pltpu.VMEM((tm, tn), jnp.float32)],
        ),
        compiler_params=pltpu.CompilerParams(
            dimension_semantics=("parallel", "parallel", "arbitrary"),
            vmem_limit_bytes=32 * 1024 * 1024,
        ),
        cost_estimate=cost,
    )(x2d, w, b2d, x2d)

    return out2d.reshape(B, S, D)


def reference_forward(x, w, b):
    # pure-JAX f32 reference of fn(x) + x with fn = Linear(D, D)
    xf = x.astype(jnp.float32)
    wf = w.astype(jnp.float32)
    bf = b.astype(jnp.float32)
    return jnp.einsum("bsd,de->bse", xf, wf) + bf[None, None, :] + xf


if __name__ == "__main__":
    # TODO(synk): Residual's `fn` is an arbitrary submodule in PyTorch; a Linear
    # layer is used here as a deterministic, representative instantiation.
    B, S, D = 2, 256, 256          # M = B*S = 512; lane-dense D (multiple of 128)

    key = jax.random.PRNGKey(0)
    kx, kw, kb = jax.random.split(key, 3)
    x = jax.random.normal(kx, (B, S, D), dtype=jnp.float32).astype(jnp.bfloat16)
    w = (jax.random.normal(kw, (D, D), dtype=jnp.float32)
         * (1.0 / jnp.sqrt(D))).astype(jnp.bfloat16)
    b = (jax.random.normal(kb, (D,), dtype=jnp.float32) * 0.01).astype(jnp.bfloat16)

    out = residual_forward(x, w, b)
    out = jax.block_until_ready(out)

    ref = reference_forward(x, w, b)
    assert out.shape == x.shape, (out.shape, x.shape)
    err = jnp.max(jnp.abs(out.astype(jnp.float32) - ref))
    assert jnp.allclose(out.astype(jnp.float32), ref, atol=2e-2, rtol=2e-2), (
        "mismatch vs reference, max abs err", err)

    print("KERNEL_OK")
</pallas_src>

<mosaic_0001>
module attributes {stable_mosaic.version = 11 : i64} {
  func.func @residual_kernel(%arg0: i32, %arg1: i32, %arg2: i32, %arg3: memref<128x128xbf16, #tpu.memory_space<vmem>>, %arg4: memref<128x128xbf16, #tpu.memory_space<vmem>>, %arg5: memref<1x128xbf16, #tpu.memory_space<vmem>>, %arg6: memref<128x128xbf16, #tpu.memory_space<vmem>>, %arg7: memref<128x128xbf16, #tpu.memory_space<vmem>>, %arg8: memref<128x128xf32, #tpu.memory_space<vmem>>) attributes {dimension_semantics = [#tpu.dimension_semantics<parallel>, #tpu.dimension_semantics<parallel>, #tpu.dimension_semantics<arbitrary>], iteration_bounds = array<i64: 4, 2, 2>, scalar_prefetch = 0 : i64, scratch_operands = 1 : i64, tpu.core_type = #tpu.core_type<tc>, window_params = [{transform_indices = @transform_0, window_bounds = array<i64: 128, 128>}, {transform_indices = @transform_1, window_bounds = array<i64: 128, 128>}, {transform_indices = @transform_2, window_bounds = array<i64: 1, 128>}, {transform_indices = @transform_3, window_bounds = array<i64: 128, 128>}, {transform_indices = @transform_4, window_bounds = array<i64: 128, 128>}]} {
    %c0_i32 = arith.constant 0 : i32
    %0 = arith.cmpi eq, %arg2, %c0_i32 : i32
    %1 = arith.extui %0 : i1 to i32
    %c0_i32_0 = arith.constant 0 : i32
    %2 = arith.cmpi ne, %1, %c0_i32_0 : i32
    scf.if %2 {
      %cst_9 = arith.constant 0.000000e+00 : f32
      %12 = vector.broadcast %cst_9 : f32 to vector<128x128xf32>
      %c0_10 = arith.constant 0 : index
      %c0_11 = arith.constant 0 : index
      %13 = vector.load %arg8[%c0_10, %c0_11] : memref<128x128xf32, #tpu.memory_space<vmem>>, vector<128x128xf32>
      tpu.vector_store %arg8[%c0_10, %c0_11], %12 {strides = array<i32>} : memref<128x128xf32, #tpu.memory_space<vmem>>, vector<128x128xf32>,
    } else {
    }
    %c0 = arith.constant 0 : index
    %c0_1 = arith.constant 0 : index
    %3 = vector.load %arg8[%c0, %c0_1] : memref<128x128xf32, #tpu.memory_space<vmem>>, vector<128x128xf32>
    %c0_2 = arith.constant 0 : index
    %c0_3 = arith.constant 0 : index
    %4 = vector.load %arg3[%c0_2, %c0_3] : memref<128x128xbf16, #tpu.memory_space<vmem>>, vector<128x128xbf16>
    %c0_4 = arith.constant 0 : index
    %c0_5 = arith.constant 0 : index
    %5 = vector.load %arg4[%c0_4, %c0_5] : memref<128x128xbf16, #tpu.memory_space<vmem>>, vector<128x128xbf16>
    %cst = arith.constant dense<0.000000e+00> : vector<128x128xf32>
    %6 = tpu.matmul %4, %5, %cst {dimension_numbers = #tpu.dot_dimension_numbers<[1], [0], [0], [1], [0, 0, 1, 1], [], []>} : vector<128x128xbf16>, vector<128x128xbf16>, vector<128x128xf32> -> vector<128x128xf32>
    %7 = arith.addf %3, %6 : vector<128x128xf32>
    %c0_6 = arith.constant 0 : index
    %c0_7 = arith.constant 0 : index
    %8 = vector.load %arg8[%c0_6, %c0_7] : memref<128x128xf32, #tpu.memory_space<vmem>>, vector<128x128xf32>
    tpu.vector_store %arg8[%c0_6, %c0_7], %7 {strides = array<i32>} : memref<128x128xf32, #tpu.memory_space<vmem>>, vector<128x128xf32>,
    %c1_i32 = arith.constant 1 : i32
    %9 = arith.cmpi eq, %arg2, %c1_i32 : i32
    %10 = arith.extui %9 : i1 to i32
    %c0_i32_8 = arith.constant 0 : i32
    %11 = arith.cmpi ne, %10, %c0_i32_8 : i32
    scf.if %11 {
      %c0_9 = arith.constant 0 : index
      %c0_10 = arith.constant 0 : index
      %12 = vector.load %arg8[%c0_9, %c0_10] : memref<128x128xf32, #tpu.memory_space<vmem>>, vector<128x128xf32>
      %c0_11 = arith.constant 0 : index
      %c0_12 = arith.constant 0 : index
      %13 = vector.load %arg5[%c0_11, %c0_12] : memref<1x128xbf16, #tpu.memory_space<vmem>>, vector<1x128xbf16>
      %14 = arith.extf %13 : vector<1x128xbf16> to vector<1x128xf32>
      %15 = vector.broadcast %14 : vector<1x128xf32> to vector<128x128xf32>
      %16 = arith.addf %12, %15 : vector<128x128xf32>
      %c0_13 = arith.constant 0 : index
      %c0_14 = arith.constant 0 : index
      %17 = vector.load %arg6[%c0_13, %c0_14] : memref<128x128xbf16, #tpu.memory_space<vmem>>, vector<128x128xbf16>
      %18 = arith.extf %17 : vector<128x128xbf16> to vector<128x128xf32>
      %19 = arith.addf %16, %18 : vector<128x128xf32>
      %20 = arith.truncf %19 : vector<128x128xf32> to vector<128x128xbf16>
      %c0_15 = arith.constant 0 : index
      %c0_16 = arith.constant 0 : index
      %21 = vector.load %arg7[%c0_15, %c0_16] : memref<128x128xbf16, #tpu.memory_space<vmem>>, vector<128x128xbf16>
      tpu.vector_store %arg7[%c0_15, %c0_16], %20 {strides = array<i32>} : memref<128x128xbf16, #tpu.memory_space<vmem>>, vector<128x128xbf16>,
    } else {
    }
    return
  }
  func.func @transform_0(%arg0: i32, %arg1: i32, %arg2: i32) -> (i32, i32) {
    %c0_i32 = arith.constant 0 : i32
    return %arg0, %arg2 : i32, i32
  }
  func.func @transform_1(%arg0: i32, %arg1: i32, %arg2: i32) -> (i32, i32) {
    %c0_i32 = arith.constant 0 : i32
    return %arg2, %arg1 : i32, i32
  }
  func.func @transform_2(%arg0: i32, %arg1: i32, %arg2: i32) -> (i32, i32) {
    %c0_i32 = arith.constant 0 : i32
    %c0_i32_0 = arith.constant 0 : i32
    return %c0_i32, %arg1 : i32, i32
  }
  func.func @transform_3(%arg0: i32, %arg1: i32, %arg2: i32) -> (i32, i32) {
    %c0_i32 = arith.constant 0 : i32
    return %arg0, %arg1 : i32, i32
  }
  func.func @transform_4(%arg0: i32, %arg1: i32, %arg2: i32) -> (i32, i32) {
    %c0_i32 = arith.constant 0 : i32
    return %arg0, %arg1 : i32, i32
  }
}

</mosaic_0001>

<llo_original>
// kernel: residual_forward.1
$region0: #{residual_forward.1}
  #allocation0 [shape = 'u32[]', space=smem, size = 0x4, offset = 0x4, fixed_abs, tag = 'smem constant byte address 0x4 - core index']
  #allocation1 [shape = 'u32[144,128]{1,0:T(1,128)}', space=vmem, size = 0x12000, scoped, tag = 'internal scratch']
  #allocation2 [shape = 'f32[128,128]{1,0:T(8,128)}', space=vmem, size = 0x10000, scoped, tag = 'scratch operand']
  %s0 = inlined_call_operand.hbm [shape: bf16[512,256], index: 0, kind: input, shape index: {}, may-alias: {0,3}]
  %s1 = inlined_call_operand.hbm [shape: bf16[256,256], index: 1, kind: input, shape index: {}]
  %s2 = inlined_call_operand.vmem [shape: bf16[1,256], index: 2, kind: input, shape index: {}]
  %s3 = inlined_call_operand.hbm [shape: bf16[512,256], index: 3, kind: input, shape index: {}, may-alias: {0,3}]
  %s4 = inlined_call_operand.hbm [shape: bf16[512,256], index: 4, kind: output, shape index: {}]
  %s5 = sld [smem:[#allocation0]]
  $region69: #{residual_forward.1} parent=0
    _
  %s7 = ssub.s32 1, %s5
  %s8 = scalar_select 0, %s7, %s5
  $region1: #{residual_forward.1} parent=0
    #allocation3 [shape = 'u8[65536]{0}', space=vmem, size = 0x10000, scoped, tag = 'input window, operand 0']
    #allocation4 [shape = 's32[2]{0}', space=sflag, size = 0x8, scoped, tag = 'scoped memory for residual_forward.1']
    #allocation5 [shape = 's32[2]{0}', space=sflag, size = 0x8, scoped, tag = 'scoped memory for residual_forward.1']
    #allocation6 [shape = 'u8[65536]{0}', space=vmem, size = 0x10000, scoped, tag = 'input window, operand 1']
    #allocation7 [shape = 's32[2]{0}', space=sflag, size = 0x8, scoped, tag = 'scoped memory for residual_forward.1']
    #allocation8 [shape = 'u8[65536]{0}', space=vmem, size = 0x10000, scoped, tag = 'input window, operand 3']
    #allocation9 [shape = 'u8[65536]{0}', space=vmem, size = 0x10000, scoped, tag = 'output window, operand 0']
    %9 = vsyncpa [#allocation4], 0
    %s10 = scalar_lea.sflag [#allocation4], 1
    %11 = vsyncpa %s10, 0
    %12 = vsyncpa [#allocation7], 0
    %s13 = scalar_lea.sflag [#allocation7], 1
    %14 = vsyncpa %s13, 0
    %15 = vsyncpa [#allocation5], 0
    %s16 = scalar_lea.sflag [#allocation5], 1
    %17 = vsyncpa %s16, 0
    loop: start=0, step=1, limit=18
    $region2: #{residual_forward.1} parent=1 // loop_pre_header
      _
    $region3: #{residual_forward.1} parent=1 // loop_header
      %s19 = sphi 0, %s23
      %p20 = scmp.ge.s32.totalorder %s19, 18
      %s26 = sphi 0, %s45
      %s27 = sphi 0, %s41
      %s28 = sphi 0, %s37
      %s29 = sphi 0, %s26
      %s30 = sphi 0, %s27
      %s31 = sphi 0, %s28
      %s32 = sphi 0, %s29
      %s33 = sphi 0, %s30
      %s34 = sphi 0, %s31
      %s50 = sphi 0, %s52
      %s53 = sphi 0, %s50
      %s54 = sphi 0, %s53
      %s70 = sphi 0, %s54
      %s78 = sphi 0, %s80
      %s81 = sphi 0, %s78
      %s82 = sphi 0, %s81
      %s98 = sphi 0, %s82
      %s104 = sphi 0, %s106
      %s107 = sphi 0, %s104
      %s108 = sphi 0, %s107
      %s124 = sphi 0, %s108
      %s132 = sphi 0, %s134
      %s135 = sphi 0, %s132
      %s136 = sphi 0, %s135
      %s152 = sphi 0, %s136
      %s160 = sphi 0, %s162
      %s163 = sphi 0, %s160
      %s164 = sphi 0, %s163
      %s180 = sphi 0, %s164
    $region4: #{residual_forward.1} parent=1 // loop_header_branch
      %22 = sbr.rel (%p20) target = $region8
    $region5: #{residual_forward.1} parent=1 // loop_body
      %s24 = ssub.s32 %s19, 1
      %s25 = ssub.s32 %s19, 2
      %s35 = sadd.s32 1, %s28
      %p36 = scmp.ge.s32.totalorder %s35, 2
      %s37 = scalar_select %p36, 0, %s35
      %s38 = sadd.s32 1, %s27
      %s39 = scalar_select %p36, %s38, %s27
      %p40 = scmp.ge.s32.totalorder %s39, 2
      %s41 = scalar_select %p40, 0, %s39
      %s42 = sadd.s32 1, %s26
      %s43 = scalar_select %p40, %s42, %s26
      %p44 = scmp.ge.s32.totalorder %s43, 4
      %s45 = scalar_select %p44, 0, %s43
      %s46 = ssub.s32 %s26, %s45
      %s47 = ssub.s32 %s28, %s37
      %s48 = sor.u32 %s46, %s47
      %p49 = scmp.eq.s32.totalorder %s48, 0
      %s51 = sadd.s32 %s50, 1
      %s52 = scalar_select %p49, %s50, %s51
      %p55 = pneg %p49
      %p56 = scmp.eq.s32.totalorder %s19, 15
      %p57 = por %p55, %p56
      %p58 = scmp.ne.s32.totalorder %s50, %s53
      %p59 = scmp.eq.s32.totalorder %s19, 0
      %p60 = por %p58, %p59
      %p61 = scmp.ne.s32.totalorder %s50, %s53
      %p62 = scmp.eq.s32.totalorder %s24, 15
      %p63 = por %p61, %p62
      %p64 = scmp.ne.s32.totalorder %s53, %s54
      %p65 = scmp.eq.s32.totalorder %s24, 0
      %p66 = por %p64, %p65
      %p67 = scmp.ne.s32.totalorder %s53, %s54
      %p68 = scmp.eq.s32.totalorder %s25, 15
      %p69 = por %p67, %p68
      %p71 = scmp.ne.s32.totalorder %s54, %s70
      %p72 = scmp.eq.s32.totalorder %s25, 0
      %p73 = por %p71, %p72
      %s74 = ssub.s32 %s28, %s37
      %s75 = ssub.s32 %s27, %s41
      %s76 = sor.u32 %s74, %s75
      %p77 = scmp.eq.s32.totalorder %s76, 0
      %s79 = sadd.s32 %s78, 1
      %s80 = scalar_select %p77, %s78, %s79
      %p83 = pneg %p77
      %p84 = scmp.eq.s32.totalorder %s19, 15
      %p85 = por %p83, %p84
      %p86 = scmp.ne.s32.totalorder %s78, %s81
      %p87 = scmp.eq.s32.totalorder %s19, 0
      %p88 = por %p86, %p87
      %p89 = scmp.ne.s32.totalorder %s78, %s81
      %p90 = scmp.eq.s32.totalorder %s24, 15
      %p91 = por %p89, %p90
      %p92 = scmp.ne.s32.totalorder %s81, %s82
      %p93 = scmp.eq.s32.totalorder %s24, 0
      %p94 = por %p92, %p93
      %p95 = scmp.ne.s32.totalorder %s81, %s82
      %p96 = scmp.eq.s32.totalorder %s25, 15
      %p97 = por %p95, %p96
      %p99 = scmp.ne.s32.totalorder %s82, %s98
      %p100 = scmp.eq.s32.totalorder %s25, 0
      %p101 = por %p99, %p100
      %s102 = ssub.s32 %s27, %s41
      %p103 = scmp.eq.s32.totalorder %s102, 0
      %s105 = sadd.s32 %s104, 1
      %s106 = scalar_select %p103, %s104, %s105
      %p109 = pneg %p103
      %p110 = scmp.eq.s32.totalorder %s19, 15
      %p111 = por %p109, %p110
      %p112 = scmp.ne.s32.totalorder %s104, %s107
      %p113 = scmp.eq.s32.totalorder %s19, 0
      %p114 = por %p112, %p113
      %p115 = scmp.ne.s32.totalorder %s104, %s107
      %p116 = scmp.eq.s32.totalorder %s24, 15
      %p117 = por %p115, %p116
      %p118 = scmp.ne.s32.totalorder %s107, %s108
      %p119 = scmp.eq.s32.totalorder %s24, 0
      %p120 = por %p118, %p119
      %p121 = scmp.ne.s32.totalorder %s107, %s108
      %p122 = scmp.eq.s32.totalorder %s25, 15
      %p123 = por %p121, %p122
      %p125 = scmp.ne.s32.totalorder %s108, %s124
      %p126 = scmp.eq.s32.totalorder %s25, 0
      %p127 = por %p125, %p126
      %s128 = ssub.s32 %s26, %s45
      %s129 = ssub.s32 %s27, %s41
      %s130 = sor.u32 %s128, %s129
      %p131 = scmp.eq.s32.totalorder %s130, 0
      %s133 = sadd.s32 %s132, 1
      %s134 = scalar_select %p131, %s132, %s133
      %p137 = pneg %p131
      %p138 = scmp.eq.s32.totalorder %s19, 15
      %p139 = por %p137, %p138
      %p140 = scmp.ne.s32.totalorder %s132, %s135
      %p141 = scmp.eq.s32.totalorder %s19, 0
      %p142 = por %p140, %p141
      %p143 = scmp.ne.s32.totalorder %s132, %s135
      %p144 = scmp.eq.s32.totalorder %s24, 15
      %p145 = por %p143, %p144
      %p146 = scmp.ne.s32.totalorder %s135, %s136
      %p147 = scmp.eq.s32.totalorder %s24, 0
      %p148 = por %p146, %p147
      %p149 = scmp.ne.s32.totalorder %s135, %s136
      %p150 = scmp.eq.s32.totalorder %s25, 15
      %p151 = por %p149, %p150
      %p153 = scmp.ne.s32.totalorder %s136, %s152
      %p154 = scmp.eq.s32.totalorder %s25, 0
      %p155 = por %p153, %p154
      %s156 = ssub.s32 %s26, %s45
      %s157 = ssub.s32 %s27, %s41
      %s158 = sor.u32 %s156, %s157
      %p159 = scmp.eq.s32.totalorder %s158, 0
      %s161 = sadd.s32 %s160, 1
      %s162 = scalar_select %p159, %s160, %s161
      %p165 = pneg %p159
      %p166 = scmp.eq.s32.totalorder %s19, 15
      %p167 = por %p165, %p166
      %p168 = scmp.ne.s32.totalorder %s160, %s163
      %p169 = scmp.eq.s32.totalorder %s19, 0
      %p170 = por %p168, %p169
      %p171 = scmp.ne.s32.totalorder %s160, %s163
      %p172 = scmp.eq.s32.totalorder %s24, 15
      %p173 = por %p171, %p172
      %p174 = scmp.ne.s32.totalorder %s163, %s164
      %p175 = scmp.eq.s32.totalorder %s24, 0
      %p176 = por %p174, %p175
      %p177 = scmp.ne.s32.totalorder %s163, %s164
      %p178 = scmp.eq.s32.totalorder %s25, 15
      %p179 = por %p177, %p178
      %p181 = scmp.ne.s32.totalorder %s164, %s180
      %p182 = scmp.eq.s32.totalorder %s25, 0
      %p183 = por %p181, %p182
      %p184 = scmp.le.s32.totalorder 1, %s19
      %p185 = scmp.lt.s32.totalorder %s19, 17
      %p186 = pnand %p184, %p185
      %p187 = pneg %p186
      // Predicated region
      $region9: #{residual_forward.1} parent=5 // pred_check
        _
      $region10: #{residual_forward.1} parent=5 // pred_check_branch
        %189 = sbr.rel (%p186) target = $region12
      $region11: #{residual_forward.1} parent=5 // pred_region
        %s190 = ssub.s32 %s19, 1
      $region12: #{residual_forward.1} parent=5 // pred_fallthru
        _
      %p191 = scmp.lt.s32.totalorder %s19, 16
      // Predicated region
      $region13: #{residual_forward.1} parent=5 // pred_check
        %p192 = pneg %p191
      $region14: #{residual_forward.1} parent=5 // pred_check_branch
        %194 = sbr.rel (%p192) target = $region16
      $region15: #{residual_forward.1} parent=5 // pred_region
        // Predicated region
        $region17: #{residual_forward.1} parent=15 // pred_check
          %p195 = pneg %p60
        $region18: #{residual_forward.1} parent=15 // pred_check_branch
          %197 = sbr.rel (%p195) target = $region20
        $region19: #{residual_forward.1} parent=15 // pred_region
          %s198 = sand.u32 %s50, 1
          %s199 = scalar_lea.sflag [#allocation4], %s198
          %s200 = sand.u32 %s50, 1
          %s201 = smul.addr %s200, 64
          %s202 = scalar_lea.vmem [#allocation3], %s201
          %s203 = smul.u32 16, %s26
          %s205 = ssub.s32 1024, 1024
          %206 = vsyncadd %s199, %s205
          %s207 = smul.addr %s203, 2
          %s208 = sadd.s32 %s28, %s207
          %s209 = smul.addr %s208, 64
          %s210 = scalar_lea.hbm %s0, %s209
          %s211 = sshll.u32 %s202, 4
          %s212 = int_to_ptr.vmem [resolvable:$true] %s211
          %217 = dma.hbm_to_vmem [thread:$0]  %s210, 1024, %s212, %s199, 128, 64, 4
        $region20: #{residual_forward.1} parent=15 // pred_fallthru
          _
        // Predicated region
        $region21: #{residual_forward.1} parent=15 // pred_check
          %p218 = pneg %p88
        $region22: #{residual_forward.1} parent=15 // pred_check_branch
          %220 = sbr.rel (%p218) target = $region24
        $region23: #{residual_forward.1} parent=15 // pred_region
          %s221 = sand.u32 %s19, 1
          %s222 = scalar_lea.sflag [#allocation7], %s221
          %s223 = sand.u32 %s78, 1
          %s224 = smul.addr %s223, 64
          %s225 = scalar_lea.vmem [#allocation6], %s224
          %s226 = smul.u32 16, %s28
          %s228 = ssub.s32 1024, 1024
          %229 = vsyncadd %s222, %s228
          %s230 = smul.addr %s226, 2
          %s231 = sadd.s32 %s27, %s230
          %s232 = smul.addr %s231, 64
          %s233 = scalar_lea.hbm %s1, %s232
          %s234 = sshll.u32 %s225, 4
          %s235 = int_to_ptr.vmem [resolvable:$true] %s234
          %240 = dma.hbm_to_vmem [thread:$0]  %s233, 1024, %s235, %s222, 128, 64, 4
        $region24: #{residual_forward.1} parent=15 // pred_fallthru
          _
        // Predicated region
        $region25: #{residual_forward.1} parent=15 // pred_check
          %p241 = pneg %p114
        $region26: #{residual_forward.1} parent=15 // pred_check_branch
          %243 = sbr.rel (%p241) target = $region28
        $region27: #{residual_forward.1} parent=15 // pred_region
          %p244 = scmp.lt.s32.totalorder %s27, 1
          %s245 = scalar_select %p244, %s27, 1
          %s246 = scalar_lea.vmem %s2, %s245
        $region28: #{residual_forward.1} parent=15 // pred_fallthru
          _
        // Predicated region
        $region29: #{residual_forward.1} parent=15 // pred_check
          %p247 = pneg %p142
        $region30: #{residual_forward.1} parent=15 // pred_check_branch
          %249 = sbr.rel (%p247) target = $region32
        $region31: #{residual_forward.1} parent=15 // pred_region
          %s250 = sand.u32 %s19, 1
          %s251 = scalar_lea.sflag [#allocation7], %s250
          %s252 = sand.u32 %s132, 1
          %s253 = smul.addr %s252, 64
          %s254 = scalar_lea.vmem [#allocation8], %s253
          %s255 = smul.u32 16, %s26
          %s257 = ssub.s32 1024, 1024
          %258 = vsyncadd %s251, %s257
          %s259 = smul.addr %s255, 2
          %s260 = sadd.s32 %s27, %s259
          %s261 = smul.addr %s260, 64
          %s262 = scalar_lea.hbm %s3, %s261
          %s263 = sshll.u32 %s254, 4
          %s264 = int_to_ptr.vmem [resolvable:$true] %s263
          %269 = dma.hbm_to_vmem [thread:$0]  %s262, 1024, %s264, %s251, 128, 64, 4
        $region32: #{residual_forward.1} parent=15 // pred_fallthru
          _
      $region16: #{residual_forward.1} parent=5 // pred_fallthru
        _
      %p270 = scmp.le.s32.totalorder 1, %s19
      %p271 = scmp.lt.s32.totalorder %s19, 17
      %p272 = pnand %p270, %p271
      %p273 = pneg %p272
      // Predicated region
      $region33: #{residual_forward.1} parent=5 // pred_check
        _
      $region34: #{residual_forward.1} parent=5 // pred_check_branch
        %275 = sbr.rel (%p272) target = $region36
      $region35: #{residual_forward.1} parent=5 // pred_region
        %s276 = ssub.s32 %s19, 1
        %s277 = sand.u32 %s53, 1
        %s278 = scalar_lea.sflag [#allocation4], %s277
        %s279 = sand.u32 %s53, 1
        %s280 = smul.addr %s279, 64
        %s281 = scalar_lea.vmem [#allocation3], %s280
        // Predicated region
        $region37: #{residual_forward.1} parent=35 // pred_check
          %p282 = pneg %p66
        $region38: #{residual_forward.1} parent=35 // pred_check_branch
          %284 = sbr.rel (%p282) target = $region40
        $region39: #{residual_forward.1} parent=35 // pred_region
          %285 = dma.done %s278, 1024
        $region40: #{residual_forward.1} parent=35 // pred_fallthru
          _
        %s286 = sand.u32 %s24, 1
        %s287 = scalar_lea.sflag [#allocation7], %s286
        %s288 = sand.u32 %s81, 1
        %s289 = smul.addr %s288, 64
        %s290 = scalar_lea.vmem [#allocation6], %s289
        // Predicated region
        $region41: #{residual_forward.1} parent=35 // pred_check
          %p291 = pneg %p94
        $region42: #{residual_forward.1} parent=35 // pred_check_branch
          %293 = sbr.rel (%p291) target = $region44
        $region43: #{residual_forward.1} parent=35 // pred_region
          %294 = dma.done %s287, 1024
        $region44: #{residual_forward.1} parent=35 // pred_fallthru
          _
        %s295 = sand.u32 %s24, 1
        %s296 = scalar_lea.sflag [#allocation7], %s295
        %s297 = sand.u32 %s135, 1
        %s298 = smul.addr %s297, 64
        %s299 = scalar_lea.vmem [#allocation8], %s298
        // Predicated region
        $region45: #{residual_forward.1} parent=35 // pred_check
          %p300 = pneg %p148
        $region46: #{residual_forward.1} parent=35 // pred_check_branch
          %302 = sbr.rel (%p300) target = $region48
        $region47: #{residual_forward.1} parent=35 // pred_region
          %303 = dma.done %s296, 1024
        $region48: #{residual_forward.1} parent=35 // pred_fallthru
          _
        %s304 = sand.u32 %s53, 1
        %s305 = scalar_lea.sflag [#allocation4], %s304
        %s306 = sand.u32 %s53, 1
        %s307 = smul.addr %s306, 64
        %s308 = scalar_lea.vmem [#allocation3], %s307
        %p309 = pneg %p66
        %p310 = pneg %p63
        %s311 = sand.u32 %s24, 1
        %s312 = scalar_lea.sflag [#allocation7], %s311
        %s313 = sand.u32 %s81, 1
        %s314 = smul.addr %s313, 64
        %s315 = scalar_lea.vmem [#allocation6], %s314
        %p316 = pneg %p94
        %p317 = pneg %p91
        %p318 = scmp.lt.s32.totalorder %s30, 1
        %s319 = scalar_select %p318, %s30, 1
        %s320 = scalar_lea.vmem %s2, %s319
        %p321 = pneg %p120
        %p322 = pneg %p117
        %s323 = sand.u32 %s24, 1
        %s324 = scalar_lea.sflag [#allocation7], %s323
        %s325 = sand.u32 %s135, 1
        %s326 = smul.addr %s325, 64
        %s327 = scalar_lea.vmem [#allocation8], %s326
        %p328 = pneg %p148
        %p329 = pneg %p145
        %p330 = pneg %p176
        %p331 = pneg %p173
        %s332 = sand.u32 %s163, 1
        %s333 = scalar_lea.sflag [#allocation5], %s332
        %s334 = sand.u32 %s163, 1
        %s335 = smul.addr %s334, 64
        %s336 = scalar_lea.vmem [#allocation9], %s335
        %s337 = smul.u32 16, %s29
        %s338 = smul.u32 16, %s31
        %p339 = scmp.lt.s32.totalorder %s30, 1
        %s340 = scalar_select %p339, %s30, 1
        %s341 = scalar_lea.vmem %s2, %s340
        %s342 = smul.u32 16, %s29
        %s343 = smul.u32 16, %s29
        %p345 = scmp.eq.s32.totalorder %s31, 0
        // Predicated region
        $region49: #{residual_forward.1} parent=35 // pred_check
          %p346 = pneg %p345
        $region50: #{residual_forward.1} parent=35 // pred_check_branch
          %348 = sbr.rel (%p346) target = $region52
        $region51: #{residual_forward.1} parent=35 // pred_region
          %349 = vst [vmem:[#allocation2] sm:$0xff] 0.0
          %350 = vst [vmem:[#allocation2 + $0x8] sm:$0xff] 0.0
          %351 = vst [vmem:[#allocation2 + $0x10] sm:$0xff] 0.0
          %352 = vst [vmem:[#allocation2 + $0x18] sm:$0xff] 0.0
          %353 = vst [vmem:[#allocation2 + $0x20] sm:$0xff] 0.0
          %354 = vst [vmem:[#allocation2 + $0x28] sm:$0xff] 0.0
          %355 = vst [vmem:[#allocation2 + $0x30] sm:$0xff] 0.0
          %356 = vst [vmem:[#allocation2 + $0x38] sm:$0xff] 0.0
          %357 = vst [vmem:[#allocation2 + $0x40] sm:$0xff] 0.0
          %358 = vst [vmem:[#allocation2 + $0x48] sm:$0xff] 0.0
          %359 = vst [vmem:[#allocation2 + $0x50] sm:$0xff] 0.0
          %360 = vst [vmem:[#allocation2 + $0x58] sm:$0xff] 0.0
          %361 = vst [vmem:[#allocation2 + $0x60] sm:$0xff] 0.0
          %362 = vst [vmem:[#allocation2 + $0x68] sm:$0xff] 0.0
          %363 = vst [vmem:[#allocation2 + $0x70] sm:$0xff] 0.0
          %364 = vst [vmem:[#allocation2 + $0x78] sm:$0xff] 0.0
        $region52: #{residual_forward.1} parent=35 // pred_fallthru
          _
        %v365 = vld [vmem:[#allocation2] sm:$0xff]
        %v366 = vld [vmem:[#allocation2 + $0x8] sm:$0xff]
        %v367 = vld [vmem:[#allocation2 + $0x10] sm:$0xff]
        %v368 = vld [vmem:[#allocation2 + $0x18] sm:$0xff]
        %v369 = vld [vmem:[#allocation2 + $0x20] sm:$0xff]
        %v370 = vld [vmem:[#allocation2 + $0x28] sm:$0xff]
        %v371 = vld [vmem:[#allocation2 + $0x30] sm:$0xff]
        %v372 = vld [vmem:[#allocation2 + $0x38] sm:$0xff]
        %v373 = vld [vmem:[#allocation2 + $0x40] sm:$0xff]
        %v374 = vld [vmem:[#allocation2 + $0x48] sm:$0xff]
        %v375 = vld [vmem:[#allocation2 + $0x50] sm:$0xff]
        %v376 = vld [vmem:[#allocation2 + $0x58] sm:$0xff]
        %v377 = vld [vmem:[#allocation2 + $0x60] sm:$0xff]
        %v378 = vld [vmem:[#allocation2 + $0x68] sm:$0xff]
        %v379 = vld [vmem:[#allocation2 + $0x70] sm:$0xff]
        %v380 = vld [vmem:[#allocation2 + $0x78] sm:$0xff]
        %v381 = vld [vmem:[%s281] sm:$0xf]
        %v382 = vld [vmem:[%s281 + $0x4] sm:$0xf]
        %v383 = vld [vmem:[%s281 + $0x8] sm:$0xf]
        %v384 = vld [vmem:[%s281 + $0xc] sm:$0xf]
        %v385 = vld [vmem:[%s281 + $0x10] sm:$0xf]
        %v386 = vld [vmem:[%s281 + $0x14] sm:$0xf]
        %v387 = vld [vmem:[%s281 + $0x18] sm:$0xf]
        %v388 = vld [vmem:[%s281 + $0x1c] sm:$0xf]
        %v389 = vld [vmem:[%s281 + $0x20] sm:$0xf]
        %v390 = vld [vmem:[%s281 + $0x24] sm:$0xf]
        %v391 = vld [vmem:[%s281 + $0x28] sm:$0xf]
        %v392 = vld [vmem:[%s281 + $0x2c] sm:$0xf]
        %v393 = vld [vmem:[%s281 + $0x30] sm:$0xf]
        %v394 = vld [vmem:[%s281 + $0x34] sm:$0xf]
        %v395 = vld [vmem:[%s281 + $0x38] sm:$0xf]
        %v396 = vld [vmem:[%s281 + $0x3c] sm:$0xf]
        %v397 = vld [vmem:[%s290] sm:$0xf]
        %v398 = vld [vmem:[%s290 + $0x4] sm:$0xf]
        %v399 = vld [vmem:[%s290 + $0x8] sm:$0xf]
        %v400 = vld [vmem:[%s290 + $0xc] sm:$0xf]
        %v401 = vld [vmem:[%s290 + $0x10] sm:$0xf]
        %v402 = vld [vmem:[%s290 + $0x14] sm:$0xf]
        %v403 = vld [vmem:[%s290 + $0x18] sm:$0xf]
        %v404 = vld [vmem:[%s290 + $0x1c] sm:$0xf]
        %v405 = vld [vmem:[%s290 + $0x20] sm:$0xf]
        %v406 = vld [vmem:[%s290 + $0x24] sm:$0xf]
        %v407 = vld [vmem:[%s290 + $0x28] sm:$0xf]
        %v408 = vld [vmem:[%s290 + $0x2c] sm:$0xf]
        %v409 = vld [vmem:[%s290 + $0x30] sm:$0xf]
        %v410 = vld [vmem:[%s290 + $0x34] sm:$0xf]
        %v411 = vld [vmem:[%s290 + $0x38] sm:$0xf]
        %v412 = vld [vmem:[%s290 + $0x3c] sm:$0xf]
        %v429 = vunpack.c.l.b16 %v381
        %v430 = vunpack.c.l.b16 %v382
        %v431 = vunpack.c.l.b16 %v383
        %v432 = vunpack.c.l.b16 %v384
        %v433 = vunpack.c.l.b16 %v385
        %v434 = vunpack.c.l.b16 %v386
        %v435 = vunpack.c.l.b16 %v387
        %v436 = vunpack.c.l.b16 %v388
        %v437 = vunpack.c.l.b16 %v389
        %v438 = vunpack.c.l.b16 %v390
        %v439 = vunpack.c.l.b16 %v391
        %v440 = vunpack.c.l.b16 %v392
        %v441 = vunpack.c.l.b16 %v393
        %v442 = vunpack.c.l.b16 %v394
        %v443 = vunpack.c.l.b16 %v395
        %v444 = vunpack.c.l.b16 %v396
        %v445 = vpack.c.b16 %v430, %v429
        %v446 = vpack.c.b16 %v432, %v431
        %v447 = vpack.c.b16 %v434, %v433
        %v448 = vpack.c.b16 %v436, %v435
        %v449 = vpack.c.b16 %v438, %v437
        %v450 = vpack.c.b16 %v440, %v439
        %v451 = vpack.c.b16 %v442, %v441
        %v452 = vpack.c.b16 %v444, %v443
        %v477 = vunpack.c.l.b16 %v397
        %v478 = vunpack.c.l.b16 %v398
        %v479 = vunpack.c.l.b16 %v399
        %v480 = vunpack.c.l.b16 %v400
        %v481 = vunpack.c.l.b16 %v401
        %v482 = vunpack.c.l.b16 %v402
        %v483 = vunpack.c.l.b16 %v403
        %v484 = vunpack.c.l.b16 %v404
        %v485 = vunpack.c.l.b16 %v405
        %v486 = vunpack.c.l.b16 %v406
        %v487 = vunpack.c.l.b16 %v407
        %v488 = vunpack.c.l.b16 %v408
        %v489 = vunpack.c.l.b16 %v409
        %v490 = vunpack.c.l.b16 %v410
        %v491 = vunpack.c.l.b16 %v411
        %v492 = vunpack.c.l.b16 %v412
        %v493 = vpack.c.b16 %v478, %v477
        %v494 = vpack.c.b16 %v480, %v479
        %v495 = vpack.c.b16 %v482, %v481
        %v496 = vpack.c.b16 %v484, %v483
        %v497 = vpack.c.b16 %v486, %v485
        %v498 = vpack.c.b16 %v488, %v487
        %v499 = vpack.c.b16 %v490, %v489
        %v500 = vpack.c.b16 %v492, %v491
        %509 = vmatprep.subr.bf16.mxu0 0
        %510 = vmatpush1.bf16.msra.mxu0 %v493
        %511 = vmatprep.subr.bf16.mxu0 0
        %512 = vmatpush1.bf16.msra.mxu0 %v494
        %513 = vmatprep.subr.bf16.mxu0 0
        %514 = vmatpush1.bf16.msra.mxu0 %v495
        %515 = vmatprep.subr.bf16.mxu0 0
        %516 = vmatpush1.bf16.msra.mxu0 %v496
        %517 = vmatprep.subr.bf16.mxu0 0
        %518 = vmatpush1.bf16.msra.mxu0 %v497
        %519 = vmatprep.subr.bf16.mxu0 0
        %520 = vmatpush1.bf16.msra.mxu0 %v498
        %521 = vmatprep.subr.bf16.mxu0 0
        %522 = vmatpush1.bf16.msra.mxu0 %v499
        %523 = vmatprep.subr.bf16.mxu0 0
        %524 = vmatpush1.bf16.msra.mxu0 %v500
        %525 = vmatprep.subr.bf16.mxu0 0
        %526 = vmatpush1.bf16.msra.mxu0 0
        %527 = vmatprep.subr.bf16.mxu0 0
        %528 = vmatpush1.bf16.msra.mxu0 0
        %529 = vmatprep.subr.bf16.mxu0 0
        %530 = vmatpush1.bf16.msra.mxu0 0
        %531 = vmatprep.subr.bf16.mxu0 0
        %532 = vmatpush1.bf16.msra.mxu0 0
        %533 = vmatprep.subr.bf16.mxu0 0
        %534 = vmatpush1.bf16.msra.mxu0 0
        %535 = vmatprep.subr.bf16.mxu0 0
        %536 = vmatpush1.bf16.msra.mxu0 0
        %537 = vmatprep.subr.bf16.mxu0 0
        %538 = vmatpush1.bf16.msra.mxu0 0
        %539 = vmatprep.subr.bf16.mxu0 0
        %540 = vmatpush1.bf16.msra.mxu0 0
        %541 = vmatprep.mubr.bf16.mxu0 0
        %542 = vmatmul.mubr.bf16.gmra.mrb[0].mxu0 %v445
        %v543 = vpop.f32.mrb[0].mxu0
        %v544 = vadd.f32 0.0, %v543
        %v545 = vpop.f32.mrb[0].mxu0
        %v546 = vpop.f32.mrb[0].mxu0
        %v547 = vadd.f32 0.0, %v546
        %v548 = vpop.f32.mrb[0].mxu0
        %549 = vmatprep.mubr.bf16.mxu0 0
        %550 = vmatmul.mubr.bf16.gmra.mrb[0].mxu0 %v446
        %v551 = vpop.f32.mrb[0].mxu0
        %v552 = vadd.f32 0.0, %v551
        %v553 = vpop.f32.mrb[0].mxu0
        %v554 = vpop.f32.mrb[0].mxu0
        %v555 = vadd.f32 0.0, %v554
        %v556 = vpop.f32.mrb[0].mxu0
        %557 = vmatprep.mubr.bf16.mxu0 0
        %558 = vmatmul.mubr.bf16.gmra.mrb[0].mxu0 %v447
        %v559 = vpop.f32.mrb[0].mxu0
        %v560 = vadd.f32 0.0, %v559
        %v561 = vpop.f32.mrb[0].mxu0
        %v562 = vpop.f32.mrb[0].mxu0
        %v563 = vadd.f32 0.0, %v562
        %v564 = vpop.f32.mrb[0].mxu0
        %565 = vmatprep.mubr.bf16.mxu0 0
        %566 = vmatmul.mubr.bf16.gmra.mrb[0].mxu0 %v448
        %v567 = vpop.f32.mrb[0].mxu0
        %v568 = vadd.f32 0.0, %v567
        %v569 = vpop.f32.mrb[0].mxu0
        %v570 = vpop.f32.mrb[0].mxu0
        %v571 = vadd.f32 0.0, %v570
        %v572 = vpop.f32.mrb[0].mxu0
        %573 = vmatprep.mubr.bf16.mxu0 0
        %574 = vmatmul.mubr.bf16.gmra.mrb[0].mxu0 %v449
        %v575 = vpop.f32.mrb[0].mxu0
        %v576 = vadd.f32 0.0, %v575
        %v577 = vpop.f32.mrb[0].mxu0
        %v578 = vpop.f32.mrb[0].mxu0
        %v579 = vadd.f32 0.0, %v578
        %v580 = vpop.f32.mrb[0].mxu0
        %581 = vmatprep.mubr.bf16.mxu0 0
        %582 = vmatmul.mubr.bf16.gmra.mrb[0].mxu0 %v450
        %v583 = vpop.f32.mrb[0].mxu0
        %v584 = vadd.f32 0.0, %v583
        %v585 = vpop.f32.mrb[0].mxu0
        %v586 = vpop.f32.mrb[0].mxu0
        %v587 = vadd.f32 0.0, %v586
        %v588 = vpop.f32.mrb[0].mxu0
        %589 = vmatprep.mubr.bf16.mxu0 0
        %590 = vmatmul.mubr.bf16.gmra.mrb[0].mxu0 %v451
        %v591 = vpop.f32.mrb[0].mxu0
        %v592 = vadd.f32 0.0, %v591
        %v593 = vpop.f32.mrb[0].mxu0
        %v594 = vpop.f32.mrb[0].mxu0
        %v595 = vadd.f32 0.0, %v594
        %v596 = vpop.f32.mrb[0].mxu0
        %597 = vmatprep.mubr.bf16.mxu0 0
        %598 = vmatmul.mubr.bf16.gmra.mrb[0].mxu0 %v452
        %v599 = vpop.f32.mrb[0].mxu0
        %v600 = vadd.f32 0.0, %v599
        %v601 = vpop.f32.mrb[0].mxu0
        %v602 = vpop.f32.mrb[0].mxu0
        %v603 = vadd.f32 0.0, %v602
        %v604 = vpop.f32.mrb[0].mxu0
        %605 = vdwg.mxu0
        %v606 = vadd.f32 %v365, %v544
        %v607 = vadd.f32 %v366, %v547
        %v608 = vadd.f32 %v367, %v552
        %v609 = vadd.f32 %v368, %v555
        %v610 = vadd.f32 %v369, %v560
        %v611 = vadd.f32 %v370, %v563
        %v612 = vadd.f32 %v371, %v568
        %v613 = vadd.f32 %v372, %v571
        %v614 = vadd.f32 %v373, %v576
        %v615 = vadd.f32 %v374, %v579
        %v616 = vadd.f32 %v375, %v584
        %v617 = vadd.f32 %v376, %v587
        %v618 = vadd.f32 %v377, %v592
        %v619 = vadd.f32 %v378, %v595
        %v620 = vadd.f32 %v379, %v600
        %v621 = vadd.f32 %v380, %v603
        %622 = vst [vmem:[#allocation2] sm:$0xff] %v606
        %623 = vst [vmem:[#allocation2 + $0x8] sm:$0xff] %v607
        %624 = vst [vmem:[#allocation2 + $0x10] sm:$0xff] %v608
        %625 = vst [vmem:[#allocation2 + $0x18] sm:$0xff] %v609
        %626 = vst [vmem:[#allocation2 + $0x20] sm:$0xff] %v610
        %627 = vst [vmem:[#allocation2 + $0x28] sm:$0xff] %v611
        %628 = vst [vmem:[#allocation2 + $0x30] sm:$0xff] %v612
        %629 = vst [vmem:[#allocation2 + $0x38] sm:$0xff] %v613
        %630 = vst [vmem:[#allocation2 + $0x40] sm:$0xff] %v614
        %631 = vst [vmem:[#allocation2 + $0x48] sm:$0xff] %v615
        %632 = vst [vmem:[#allocation2 + $0x50] sm:$0xff] %v616
        %633 = vst [vmem:[#allocation2 + $0x58] sm:$0xff] %v617
        %634 = vst [vmem:[#allocation2 + $0x60] sm:$0xff] %v618
        %635 = vst [vmem:[#allocation2 + $0x68] sm:$0xff] %v619
        %636 = vst [vmem:[#allocation2 + $0x70] sm:$0xff] %v620
        %637 = vst [vmem:[#allocation2 + $0x78] sm:$0xff] %v621
        %p638 = scmp.eq.s32.totalorder %s31, 1
        // Predicated region
        $region53: #{residual_forward.1} parent=35 // pred_check
          %p639 = pneg %p638
        $region54: #{residual_forward.1} parent=35 // pred_check_branch
          %641 = sbr.rel (%p639) target = $region56
        $region55: #{residual_forward.1} parent=35 // pred_region
          %v642 = vld [vmem:[#allocation2] sm:$0xff]
          %v643 = vld [vmem:[#allocation2 + $0x8] sm:$0xff]
          %v644 = vld [vmem:[#allocation2 + $0x10] sm:$0xff]
          %v645 = vld [vmem:[#allocation2 + $0x18] sm:$0xff]
          %v646 = vld [vmem:[#allocation2 + $0x20] sm:$0xff]
          %v647 = vld [vmem:[#allocation2 + $0x28] sm:$0xff]
          %v648 = vld [vmem:[#allocation2 + $0x30] sm:$0xff]
          %v649 = vld [vmem:[#allocation2 + $0x38] sm:$0xff]
          %v650 = vld [vmem:[#allocation2 + $0x40] sm:$0xff]
          %v651 = vld [vmem:[#allocation2 + $0x48] sm:$0xff]
          %v652 = vld [vmem:[#allocation2 + $0x50] sm:$0xff]
          %v653 = vld [vmem:[#allocation2 + $0x58] sm:$0xff]
          %v654 = vld [vmem:[#allocation2 + $0x60] sm:$0xff]
          %v655 = vld [vmem:[#allocation2 + $0x68] sm:$0xff]
          %v656 = vld [vmem:[#allocation2 + $0x70] sm:$0xff]
          %v657 = vld [vmem:[#allocation2 + $0x78] sm:$0xff]
          %v658 = vld [vmem:[%s341] sm:$0x1]
          %v659 = vunpack.c.l.bf16 %v658
          %v660 = vlaneseq
          %v661 = vshrl.u32 %v660, 7
          %v662 = vsub.s32 0, %v661
          %v663 = vrot.slane %v659, %v662
          %v664 = vadd.f32 %v642, %v663
          %v665 = vadd.f32 %v643, %v663
          %v666 = vadd.f32 %v644, %v663
          %v667 = vadd.f32 %v645, %v663
          %v668 = vadd.f32 %v646, %v663
          %v669 = vadd.f32 %v647, %v663
          %v670 = vadd.f32 %v648, %v663
          %v671 = vadd.f32 %v649, %v663
          %v672 = vadd.f32 %v650, %v663
          %v673 = vadd.f32 %v651, %v663
          %v674 = vadd.f32 %v652, %v663
          %v675 = vadd.f32 %v653, %v663
          %v676 = vadd.f32 %v654, %v663
          %v677 = vadd.f32 %v655, %v663
          %v678 = vadd.f32 %v656, %v663
          %v679 = vadd.f32 %v657, %v663
          %v680 = vld [vmem:[%s299] sm:$0xf]
          %v681 = vld [vmem:[%s299 + $0x4] sm:$0xf]
          %v682 = vld [vmem:[%s299 + $0x8] sm:$0xf]
          %v683 = vld [vmem:[%s299 + $0xc] sm:$0xf]
          %v684 = vld [vmem:[%s299 + $0x10] sm:$0xf]
          %v685 = vld [vmem:[%s299 + $0x14] sm:$0xf]
          %v686 = vld [vmem:[%s299 + $0x18] sm:$0xf]
          %v687 = vld [vmem:[%s299 + $0x1c] sm:$0xf]
          %v688 = vld [vmem:[%s299 + $0x20] sm:$0xf]
          %v689 = vld [vmem:[%s299 + $0x24] sm:$0xf]
          %v690 = vld [vmem:[%s299 + $0x28] sm:$0xf]
          %v691 = vld [vmem:[%s299 + $0x2c] sm:$0xf]
          %v692 = vld [vmem:[%s299 + $0x30] sm:$0xf]
          %v693 = vld [vmem:[%s299 + $0x34] sm:$0xf]
          %v694 = vld [vmem:[%s299 + $0x38] sm:$0xf]
          %v695 = vld [vmem:[%s299 + $0x3c] sm:$0xf]
          %v696 = vunpack.c.l.bf16 %v680
          %v697 = vunpack.c.l.bf16 %v681
          %v698 = vunpack.c.l.bf16 %v682
          %v699 = vunpack.c.l.bf16 %v683
          %v700 = vunpack.c.l.bf16 %v684
          %v701 = vunpack.c.l.bf16 %v685
          %v702 = vunpack.c.l.bf16 %v686
          %v703 = vunpack.c.l.bf16 %v687
          %v704 = vunpack.c.l.bf16 %v688
          %v705 = vunpack.c.l.bf16 %v689
          %v706 = vunpack.c.l.bf16 %v690
          %v707 = vunpack.c.l.bf16 %v691
          %v708 = vunpack.c.l.bf16 %v692
          %v709 = vunpack.c.l.bf16 %v693
          %v710 = vunpack.c.l.bf16 %v694
          %v711 = vunpack.c.l.bf16 %v695
          %v712 = vadd.f32 %v664, %v696
          %v713 = vadd.f32 %v665, %v697
          %v714 = vadd.f32 %v666, %v698
          %v715 = vadd.f32 %v667, %v699
          %v716 = vadd.f32 %v668, %v700
          %v717 = vadd.f32 %v669, %v701
          %v718 = vadd.f32 %v670, %v702
          %v719 = vadd.f32 %v671, %v703
          %v720 = vadd.f32 %v672, %v704
          %v721 = vadd.f32 %v673, %v705
          %v722 = vadd.f32 %v674, %v706
          %v723 = vadd.f32 %v675, %v707
          %v724 = vadd.f32 %v676, %v708
          %v725 = vadd.f32 %v677, %v709
          %v726 = vadd.f32 %v678, %v710
          %v727 = vadd.f32 %v679, %v711
          %v728 = vpack.c.bf16 %v713, %v712
          %v729 = vpack.c.bf16 %v715, %v714
          %v730 = vpack.c.bf16 %v717, %v716
          %v731 = vpack.c.bf16 %v719, %v718
          %v732 = vpack.c.bf16 %v721, %v720
          %v733 = vpack.c.bf16 %v723, %v722
          %v734 = vpack.c.bf16 %v725, %v724
          %v735 = vpack.c.bf16 %v727, %v726
          %v744 = vunpack.c.l.b16 %v728
          %v745 = vunpack.c.h.b16 %v728
          %v746 = vunpack.c.l.b16 %v729
          %v747 = vunpack.c.h.b16 %v729
          %v748 = vunpack.c.l.b16 %v730
          %v749 = vunpack.c.h.b16 %v730
          %v750 = vunpack.c.l.b16 %v731
          %v751 = vunpack.c.h.b16 %v731
          %v752 = vunpack.c.l.b16 %v732
          %v753 = vunpack.c.h.b16 %v732
          %v754 = vunpack.c.l.b16 %v733
          %v755 = vunpack.c.h.b16 %v733
          %v756 = vunpack.c.l.b16 %v734
          %v757 = vunpack.c.h.b16 %v734
          %v758 = vunpack.c.l.b16 %v735
          %v759 = vunpack.c.h.b16 %v735
          %v760 = vpack.c.b16 %v744, %v744
          %v761 = vpack.c.b16 %v745, %v745
          %v762 = vpack.c.b16 %v746, %v746
          %v763 = vpack.c.b16 %v747, %v747
          %v764 = vpack.c.b16 %v748, %v748
          %v765 = vpack.c.b16 %v749, %v749
          %v766 = vpack.c.b16 %v750, %v750
          %v767 = vpack.c.b16 %v751, %v751
          %v768 = vpack.c.b16 %v752, %v752
          %v769 = vpack.c.b16 %v753, %v753
          %v770 = vpack.c.b16 %v754, %v754
          %v771 = vpack.c.b16 %v755, %v755
          %v772 = vpack.c.b16 %v756, %v756
          %v773 = vpack.c.b16 %v757, %v757
          %v774 = vpack.c.b16 %v758, %v758
          %v775 = vpack.c.b16 %v759, %v759
          %792 = vst [vmem:[%s336] sm:$0xf] %v760
          %793 = vst [vmem:[%s336 + $0x4] sm:$0xf] %v761
          %794 = vst [vmem:[%s336 + $0x8] sm:$0xf] %v762
          %795 = vst [vmem:[%s336 + $0xc] sm:$0xf] %v763
          %796 = vst [vmem:[%s336 + $0x10] sm:$0xf] %v764
          %797 = vst [vmem:[%s336 + $0x14] sm:$0xf] %v765
          %798 = vst [vmem:[%s336 + $0x18] sm:$0xf] %v766
          %799 = vst [vmem:[%s336 + $0x1c] sm:$0xf] %v767
          %800 = vst [vmem:[%s336 + $0x20] sm:$0xf] %v768
          %801 = vst [vmem:[%s336 + $0x24] sm:$0xf] %v769
          %802 = vst [vmem:[%s336 + $0x28] sm:$0xf] %v770
          %803 = vst [vmem:[%s336 + $0x2c] sm:$0xf] %v771
          %804 = vst [vmem:[%s336 + $0x30] sm:$0xf] %v772
          %805 = vst [vmem:[%s336 + $0x34] sm:$0xf] %v773
          %806 = vst [vmem:[%s336 + $0x38] sm:$0xf] %v774
          %807 = vst [vmem:[%s336 + $0x3c] sm:$0xf] %v775
        $region56: #{residual_forward.1} parent=35 // pred_fallthru
          _
        %s808 = sand.u32 %s163, 1
        %s809 = scalar_lea.sflag [#allocation5], %s808
        %s810 = sand.u32 %s163, 1
        %s811 = smul.addr %s810, 64
        %s812 = scalar_lea.vmem [#allocation9], %s811
        // Predicated region
        $region57: #{residual_forward.1} parent=35 // pred_check
          %p813 = pneg %p173
        $region58: #{residual_forward.1} parent=35 // pred_check_branch
          %815 = sbr.rel (%p813) target = $region60
        $region59: #{residual_forward.1} parent=35 // pred_region
          %s816 = smul.u32 16, %s29
          %s818 = ssub.s32 1024, 1024
          %819 = vsyncadd %s809, %s818
          %s820 = smul.addr %s816, 2
          %s821 = sadd.s32 %s30, %s820
          %s822 = smul.addr %s821, 64
          %s823 = scalar_lea.hbm %s4, %s822
          %s824 = sshll.u32 %s812, 4
          %s825 = int_to_ptr.vmem [resolvable:$true] %s824
          %830 = dma.vmem_to_hbm [thread:$0]  %s825, 1024, %s823, %s809, 64, 128, 4
        $region60: #{residual_forward.1} parent=35 // pred_fallthru
          _
      $region36: #{residual_forward.1} parent=5 // pred_fallthru
        _
      %p831 = scmp.le.s32.totalorder 2, %s19
      // Predicated region
      $region61: #{residual_forward.1} parent=5 // pred_check
        %p832 = pneg %p831
      $region62: #{residual_forward.1} parent=5 // pred_check_branch
        %834 = sbr.rel (%p832) target = $region64
      $region63: #{residual_forward.1} parent=5 // pred_region
        %s835 = ssub.s32 %s19, 2
        // Predicated region
        $region65: #{residual_forward.1} parent=63 // pred_check
          %p836 = pneg %p179
        $region66: #{residual_forward.1} parent=63 // pred_check_branch
          %838 = sbr.rel (%p836) target = $region68
        $region67: #{residual_forward.1} parent=63 // pred_region
          %s839 = sand.u32 %s164, 1
          %s840 = scalar_lea.sflag [#allocation5], %s839
          %s841 = sand.u32 %s164, 1
          %s842 = smul.addr %s841, 64
          %s843 = scalar_lea.vmem [#allocation9], %s842
          %844 = dma.done %s840, 1024
        $region68: #{residual_forward.1} parent=63 // pred_fallthru
          _
      $region64: #{residual_forward.1} parent=5 // pred_fallthru
        _
    $region6: #{residual_forward.1} parent=1 // loop_footer
      %s23 = sadd.s32 1, %s19
    $region7: #{residual_forward.1} parent=1 // loop_footer_branch
      %18 = sbr.rel target = $region3
    $region8: #{residual_forward.1} parent=1 // loop_exit
      _
    %845 = vsyncpa [#allocation4], 1
    %s846 = scalar_lea.sflag [#allocation4], 1
    %847 = vsyncpa %s846, 1
    %848 = vsyncpa [#allocation7], 1
    %s849 = scalar_lea.sflag [#allocation7], 1
    %850 = vsyncpa %s849, 1
    %851 = vsyncpa [#allocation5], 1
    %s852 = scalar_lea.sflag [#allocation5], 1
    %853 = vsyncpa %s852, 1

</llo_original>
